<compile_context>
chip_gen: v5e
topology: v5e:2x2
jax: 0.10.0
libtpu: 0.0.40
codegen_flags: <defaults>
</compile_context>

<pallas_src>
import jax
import jax.numpy as jnp
from jax.experimental import pallas as pl
from jax.experimental.pallas import tpu as pltpu


# ----------------------------------------------------------------------------- kernel
def _gain_kernel(gain_ref, x_ref, o_ref):
    # gain_ref: SMEM scalar-prefetch ref holding the linear gain factor (f32).
    g = gain_ref[0]
    y = x_ref[...].astype(jnp.float32) * g
    o_ref[...] = jnp.clip(y, -1.0, 1.0).astype(o_ref.dtype)


# ----------------------------------------------------------------------------- planning helpers
def _cdiv(a, b):
    return -(-a // b)


def _round_up(a, b):
    return _cdiv(a, b) * b


def _vmem_capacity_bytes():
    """Physical VMEM of the local chip; conservative 64 MiB (v7x) if unknown."""
    try:
        info = pltpu.get_tpu_info()
        cap = int(getattr(info, "vmem_capacity_bytes", 0))
        if cap > 0:
            return cap
    except Exception:
        pass
    return 64 << 20


def _plan_blocks(R, T, itemsize, sublane, target_bytes):
    """Pick a (block_rows, block_cols) tile for a (R, T) slab.

    Footprints are computed with layout padding (rows -> sublane, cols -> 128)
    so tiny-R inputs never blow the VMEM budget.  Block dims are either a
    multiple of the hardware minimum or equal to the full array dim, so ragged
    tails never require padding the input.
    """
    t_pad_full = _round_up(T, 128)
    r_pad_min = _round_up(min(R, sublane), sublane)

    if r_pad_min * t_pad_full * itemsize <= target_bytes:
        bt = T                                     # full trailing dim (always legal)
    else:
        bt = max(128, min((T // 128) * 128 if T >= 128 else T,
                          (target_bytes // (r_pad_min * itemsize)) // 128 * 128))
    bt_pad = _round_up(bt, 128)

    max_rows = max(1, target_bytes // (bt_pad * itemsize))
    if max_rows >= R:
        br = R                                     # full dim (always legal)
    else:
        br = max(sublane, (max_rows // sublane) * sublane)
    return br, bt


def _prefer_even_steps(R, br, sublane, col_steps):
    """Nudge block_rows so the total step count is even (v7x has 2 TCs)."""
    if br >= R:
        return br
    if (_cdiv(R, br) * col_steps) % 2 == 0 or _cdiv(R, br) * col_steps <= 1:
        return br
    for cand in (br - sublane, br + sublane, br - 2 * sublane):
        if sublane <= cand < R and (_cdiv(R, cand) * col_steps) % 2 == 0:
            return cand
    return br


# ----------------------------------------------------------------------------- wrapper
def random_gain(audio: jax.Array, key: jax.Array,
                min_gain: float = -20.0, max_gain: float = -1.0) -> jax.Array:
    """Apply a random dB gain to `audio` (any shape) and clamp to [-1, 1]."""
    orig_shape = audio.shape
    dtype = audio.dtype
    itemsize = jnp.dtype(dtype).itemsize
    sublane = {4: 8, 2: 16, 1: 32}.get(itemsize, 8)

    # Random gain draw (JAX-side glue; mirrors Python's random.uniform).
    # TODO(synk): the original module uses Python's `random` RNG; here it is an
    # explicit JAX key for determinism.
    gain_db = jax.random.uniform(key, (), jnp.float32,
                                 minval=min_gain, maxval=max_gain)
    gain_lin = (10.0 ** (gain_db / 20.0)).astype(jnp.float32).reshape(1)

    vmem_cap = _vmem_capacity_bytes()
    target_block_bytes = max(4 << 20, min(16 << 20, vmem_cap // 8))

    # Free (contiguous) 2-D view: (rows, time). No padding, no copies.
    if audio.ndim >= 2:
        R = 1
        for d in orig_shape[:-1]:
            R *= int(d)
        T = int(orig_shape[-1])
    else:
        n = int(audio.size)
        R, T = 1, max(n, 1)
        if n * itemsize > target_block_bytes:
            # Long mono stream: refactor into lane-dense rows when divisible.
            for L in (4096, 2048, 1024, 512, 256, 128):
                if n % L == 0:
                    R, T = n // L, L
                    break
    x2d = audio.reshape(R, T)

    br, bt = _plan_blocks(R, T, itemsize, sublane, target_block_bytes)
    col_steps = _cdiv(T, bt)
    br = _prefer_even_steps(R, br, sublane, col_steps)
    row_steps = _cdiv(R, br)

    # VMEM budget: in + out, double-buffered, plus headroom; never exceed 3/4
    # of physical VMEM (v7x-safe).
    block_bytes = _round_up(br, sublane) * _round_up(bt, 128) * itemsize
    vmem_limit = max(32 << 20, 4 * block_bytes + (8 << 20))
    vmem_limit = int(min(vmem_limit, (vmem_cap * 3) // 4))

    out2d = pl.pallas_call(
        _gain_kernel,
        out_shape=jax.ShapeDtypeStruct((R, T), dtype),
        grid_spec=pltpu.PrefetchScalarGridSpec(
            num_scalar_prefetch=1,
            grid=(row_steps, col_steps),
            in_specs=[pl.BlockSpec((br, bt), lambda i, j, gain: (i, j))],
            out_specs=pl.BlockSpec((br, bt), lambda i, j, gain: (i, j)),
        ),
        compiler_params=pltpu.CompilerParams(
            dimension_semantics=("parallel", "parallel"),
            vmem_limit_bytes=vmem_limit),
    )(gain_lin, x2d)

    return out2d.reshape(orig_shape)


# ----------------------------------------------------------------------------- reference + test
def _reference(audio, key, min_gain=-20.0, max_gain=-1.0):
    gain_db = jax.random.uniform(key, (), jnp.float32,
                                 minval=min_gain, maxval=max_gain)
    return jnp.clip(audio.astype(jnp.float32) * (10.0 ** (gain_db / 20.0)),
                    -1.0, 1.0).astype(audio.dtype)


if __name__ == "__main__":
    root = jax.random.PRNGKey(0)
    k_a1, k_a2, k_a3, k_g1, k_g2, k_g3 = jax.random.split(root, 6)

    # Case 1: (batch=2, channels=4, samples=2048) -> collapses to one (8, 2048) tile.
    a1 = jax.random.uniform(k_a1, (2, 4, 2048), jnp.float32,
                            minval=-1.0, maxval=1.0)
    o1 = jax.block_until_ready(random_gain(a1, k_g1))
    assert o1.shape == a1.shape and o1.dtype == a1.dtype
    assert jnp.allclose(o1, _reference(a1, k_g1), atol=1e-6)

    # Case 2: ragged last dim (5001 % 128 != 0) -> full-extent trailing block,
    # no padding or slicing anywhere.
    a2 = jax.random.uniform(k_a2, (3, 5001), jnp.float32,
                            minval=-1.5, maxval=1.5)
    o2 = jax.block_until_ready(random_gain(a2, k_g2))
    assert o2.shape == a2.shape and o2.dtype == a2.dtype
    assert jnp.allclose(o2, _reference(a2, k_g2), atol=1e-6)

    # Case 3: odd-length mono stream (rank-1).
    a3 = jax.random.uniform(k_a3, (12345,), jnp.float32,
                            minval=-1.2, maxval=1.2)
    o3 = jax.block_until_ready(random_gain(a3, k_g3))
    assert o3.shape == a3.shape and o3.dtype == a3.dtype
    assert jnp.allclose(o3, _reference(a3, k_g3), atol=1e-6)

    print("KERNEL_OK")
</pallas_src>

<mosaic_0001>
module attributes {stable_mosaic.version = 11 : i64} {
  func.func @_gain_kernel(%arg0: i32, %arg1: i32, %arg2: memref<1xf32, #tpu.memory_space<smem>>, %arg3: memref<8x2048xf32, #tpu.memory_space<vmem>>, %arg4: memref<8x2048xf32, #tpu.memory_space<vmem>>) attributes {dimension_semantics = [#tpu.dimension_semantics<parallel>, #tpu.dimension_semantics<parallel>], iteration_bounds = array<i64: 1, 1>, scalar_prefetch = 1 : i64, scratch_operands = 0 : i64, tpu.core_type = #tpu.core_type<tc>, window_params = [{transform_indices = @transform_0, window_bounds = array<i64: 8, 2048>}, {transform_indices = @transform_1, window_bounds = array<i64: 8, 2048>}]} {
    %c0 = arith.constant 0 : index
    %0 = memref.load %arg2[%c0] : memref<1xf32, #tpu.memory_space<smem>>
    %c0_0 = arith.constant 0 : index
    %c0_1 = arith.constant 0 : index
    %1 = vector.load %arg3[%c0_0, %c0_1] : memref<8x2048xf32, #tpu.memory_space<vmem>>, vector<8x2048xf32>
    %2 = vector.broadcast %0 : f32 to vector<8x2048xf32>
    %3 = arith.mulf %1, %2 : vector<8x2048xf32>
    %cst = arith.constant -1.000000e+00 : f32
    %cst_2 = arith.constant 1.000000e+00 : f32
    %4 = vector.broadcast %cst : f32 to vector<8x2048xf32>
    %5 = arith.maximumf %4, %3 : vector<8x2048xf32>
    %6 = vector.broadcast %cst_2 : f32 to vector<8x2048xf32>
    %7 = arith.minimumf %6, %5 : vector<8x2048xf32>
    %c0_3 = arith.constant 0 : index
    %c0_4 = arith.constant 0 : index
    %8 = vector.load %arg4[%c0_3, %c0_4] : memref<8x2048xf32, #tpu.memory_space<vmem>>, vector<8x2048xf32>
    tpu.vector_store %arg4[%c0_3, %c0_4], %7 {strides = array<i32>} : memref<8x2048xf32, #tpu.memory_space<vmem>>, vector<8x2048xf32>,
    return
  }
  func.func @transform_0(%arg0: i32, %arg1: i32, %arg2: memref<1xf32, #tpu.memory_space<smem>>) -> (i32, i32) {
    %c0_i32 = arith.constant 0 : i32
    return %arg0, %arg1 : i32, i32
  }
  func.func @transform_1(%arg0: i32, %arg1: i32, %arg2: memref<1xf32, #tpu.memory_space<smem>>) -> (i32, i32) {
    %c0_i32 = arith.constant 0 : i32
    return %arg0, %arg1 : i32, i32
  }
}

</mosaic_0001>

<llo_original>
// kernel: tpu_custom_call.1
$region0: #{tpu_custom_call.1}
  #allocation0 [shape = 'u32[]', space=smem, size = 0x4, offset = 0x4, fixed_abs, tag = 'smem constant byte address 0x4 - core index']
  #allocation1 [shape = 'u32[72,128]{1,0:T(1,128)}', space=vmem, size = 0x9000, scoped, tag = 'internal scratch']
  #allocation2 [shape = 's32[1]{0}', space=sflag, size = 0x4, scoped, tag = 'scoped memory for tpu_custom_call.1']
  #allocation3 [shape = 'f32[1]{0:T(128)S(6)}', space=smem, size = 0x200, scoped, tag = 'prefetched SMEM operand 0']
  %s0 = inlined_call_operand.<no memory space> [shape: f32[1], index: 0, kind: input, shape index: {}]
  %s1 = inlined_call_operand.hbm [shape: f32[8,2048], index: 1, kind: input, shape index: {}]
  %s2 = inlined_call_operand.hbm [shape: f32[8,2048], index: 2, kind: output, shape index: {}]
  %s3 = sld [smem:[#allocation0]]
  $region18: #{tpu_custom_call.1} parent=0
    _
  %s5 = ssub.s32 1, %s3
  %s6 = scalar_select 0, %s5, %s3
  %7 = sst [smem:[#allocation3]] %s0
  $region1: #{tpu_custom_call.1} parent=0
    #allocation4 [shape = 'u8[65536]{0}', space=vmem, size = 0x10000, scoped, tag = 'input window, operand 1, single buffered']
    #allocation5 [shape = 's32[1]{0}', space=sflag, size = 0x4, scoped, tag = 'scoped memory for tpu_custom_call.1']
    #allocation6 [shape = 's32[1]{0}', space=sflag, size = 0x4, scoped, tag = 'scoped memory for tpu_custom_call.1']
    #allocation7 [shape = 'u8[65536]{0}', space=vmem, size = 0x10000, scoped, tag = 'output window, operand 0, single buffered']
    %8 = vsyncpa [#allocation5], 0
    %9 = vsyncpa [#allocation6], 0
    // Predicated region
    $region2: #{tpu_custom_call.1} parent=1 // pred_check
      _
    $region3: #{tpu_custom_call.1} parent=1 // pred_check_branch
      %11 = sbr.rel (0) target = $region5
    $region4: #{tpu_custom_call.1} parent=1 // pred_region
      %13 = vsyncadd [#allocation5], 0
      %s15 = sshll.u32 %s1, 4
      %s16 = int_to_ptr.hbm [resolvable:$true] %s15
      %s17 = sshll.u32 [#allocation4], 4
      %s18 = int_to_ptr.vmem [resolvable:$true] %s17
      %20 = dma.hbm_to_vmem [thread:$0]  %s16, 2048, %s18, [#allocation5]
    $region5: #{tpu_custom_call.1} parent=1 // pred_fallthru
      _
    // Predicated region
    $region6: #{tpu_custom_call.1} parent=1 // pred_check
      _
    $region7: #{tpu_custom_call.1} parent=1 // pred_check_branch
      %22 = sbr.rel (0) target = $region9
    $region8: #{tpu_custom_call.1} parent=1 // pred_region
      %24 = dma.done [#allocation5], 2048
    $region9: #{tpu_custom_call.1} parent=1 // pred_fallthru
      _
    %s25 = sld [smem:[#allocation3]]
    %v26 = vld [vmem:[#allocation4] sm:$0xff]
    %v27 = vld [vmem:[#allocation4 + $0x8] sm:$0xff]
    %v28 = vld [vmem:[#allocation4 + $0x10] sm:$0xff]
    %v29 = vld [vmem:[#allocation4 + $0x18] sm:$0xff]
    %v30 = vld [vmem:[#allocation4 + $0x20] sm:$0xff]
    %v31 = vld [vmem:[#allocation4 + $0x28] sm:$0xff]
    %v32 = vld [vmem:[#allocation4 + $0x30] sm:$0xff]
    %v33 = vld [vmem:[#allocation4 + $0x38] sm:$0xff]
    %v34 = vld [vmem:[#allocation4 + $0x40] sm:$0xff]
    %v35 = vld [vmem:[#allocation4 + $0x48] sm:$0xff]
    %v36 = vld [vmem:[#allocation4 + $0x50] sm:$0xff]
    %v37 = vld [vmem:[#allocation4 + $0x58] sm:$0xff]
    %v38 = vld [vmem:[#allocation4 + $0x60] sm:$0xff]
    %v39 = vld [vmem:[#allocation4 + $0x68] sm:$0xff]
    %v40 = vld [vmem:[#allocation4 + $0x70] sm:$0xff]
    %v41 = vld [vmem:[#allocation4 + $0x78] sm:$0xff]
    %v42 = vstv %s25
    %v43 = vmul.f32 %v26, %v42
    %v44 = vmul.f32 %v27, %v42
    %v45 = vmul.f32 %v28, %v42
    %v46 = vmul.f32 %v29, %v42
    %v47 = vmul.f32 %v30, %v42
    %v48 = vmul.f32 %v31, %v42
    %v49 = vmul.f32 %v32, %v42
    %v50 = vmul.f32 %v33, %v42
    %v51 = vmul.f32 %v34, %v42
    %v52 = vmul.f32 %v35, %v42
    %v53 = vmul.f32 %v36, %v42
    %v54 = vmul.f32 %v37, %v42
    %v55 = vmul.f32 %v38, %v42
    %v56 = vmul.f32 %v39, %v42
    %v57 = vmul.f32 %v40, %v42
    %v58 = vmul.f32 %v41, %v42
    %v59 = vmax.f32 %v43, -1.0
    %v60 = vmax.f32 %v44, -1.0
    %v61 = vmax.f32 %v45, -1.0
    %v62 = vmax.f32 %v46, -1.0
    %v63 = vmax.f32 %v47, -1.0
    %v64 = vmax.f32 %v48, -1.0
    %v65 = vmax.f32 %v49, -1.0
    %v66 = vmax.f32 %v50, -1.0
    %v67 = vmax.f32 %v51, -1.0
    %v68 = vmax.f32 %v52, -1.0
    %v69 = vmax.f32 %v53, -1.0
    %v70 = vmax.f32 %v54, -1.0
    %v71 = vmax.f32 %v55, -1.0
    %v72 = vmax.f32 %v56, -1.0
    %v73 = vmax.f32 %v57, -1.0
    %v74 = vmax.f32 %v58, -1.0
    %v75 = vmin.f32 %v59, 1.0
    %v76 = vmin.f32 %v60, 1.0
    %v77 = vmin.f32 %v61, 1.0
    %v78 = vmin.f32 %v62, 1.0
    %v79 = vmin.f32 %v63, 1.0
    %v80 = vmin.f32 %v64, 1.0
    %v81 = vmin.f32 %v65, 1.0
    %v82 = vmin.f32 %v66, 1.0
    %v83 = vmin.f32 %v67, 1.0
    %v84 = vmin.f32 %v68, 1.0
    %v85 = vmin.f32 %v69, 1.0
    %v86 = vmin.f32 %v70, 1.0
    %v87 = vmin.f32 %v71, 1.0
    %v88 = vmin.f32 %v72, 1.0
    %v89 = vmin.f32 %v73, 1.0
    %v90 = vmin.f32 %v74, 1.0
    %91 = vst [vmem:[#allocation7] sm:$0xff] %v75
    %92 = vst [vmem:[#allocation7 + $0x8] sm:$0xff] %v76
    %93 = vst [vmem:[#allocation7 + $0x10] sm:$0xff] %v77
    %94 = vst [vmem:[#allocation7 + $0x18] sm:$0xff] %v78
    %95 = vst [vmem:[#allocation7 + $0x20] sm:$0xff] %v79
    %96 = vst [vmem:[#allocation7 + $0x28] sm:$0xff] %v80
    %97 = vst [vmem:[#allocation7 + $0x30] sm:$0xff] %v81
    %98 = vst [vmem:[#allocation7 + $0x38] sm:$0xff] %v82
    %99 = vst [vmem:[#allocation7 + $0x40] sm:$0xff] %v83
    %100 = vst [vmem:[#allocation7 + $0x48] sm:$0xff] %v84
    %101 = vst [vmem:[#allocation7 + $0x50] sm:$0xff] %v85
    %102 = vst [vmem:[#allocation7 + $0x58] sm:$0xff] %v86
    %103 = vst [vmem:[#allocation7 + $0x60] sm:$0xff] %v87
    %104 = vst [vmem:[#allocation7 + $0x68] sm:$0xff] %v88
    %105 = vst [vmem:[#allocation7 + $0x70] sm:$0xff] %v89
    %106 = vst [vmem:[#allocation7 + $0x78] sm:$0xff] %v90
    // Predicated region
    $region10: #{tpu_custom_call.1} parent=1 // pred_check
      _
    $region11: #{tpu_custom_call.1} parent=1 // pred_check_branch
      %108 = sbr.rel (0) target = $region13
    $region12: #{tpu_custom_call.1} parent=1 // pred_region
      %110 = vsyncadd [#allocation6], 0
      %s112 = sshll.u32 [#allocation7], 4
      %s113 = int_to_ptr.vmem [resolvable:$true] %s112
      %s114 = sshll.u32 %s2, 4
      %s115 = int_to_ptr.hbm [resolvable:$true] %s114
      %117 = dma.vmem_to_hbm [thread:$0]  %s113, 2048, %s115, [#allocation6]
    $region13: #{tpu_custom_call.1} parent=1 // pred_fallthru
      _
    // Predicated region
    $region14: #{tpu_custom_call.1} parent=1 // pred_check
      _
    $region15: #{tpu_custom_call.1} parent=1 // pred_check_branch
      %119 = sbr.rel (0) target = $region17
    $region16: #{tpu_custom_call.1} parent=1 // pred_region
      %121 = dma.done [#allocation6], 2048
    $region17: #{tpu_custom_call.1} parent=1 // pred_fallthru
      _
    %122 = vsyncpa [#allocation5], 1
    %123 = vsyncpa [#allocation6], 1

</llo_original>
